<compile_context>
chip_gen: v7x
topology: tpu7x:2x2x1
jax: 0.10.0
libtpu: 0.0.40
codegen_flags: <defaults>
</compile_context>

<pallas_src>
import jax
import jax.numpy as jnp
import numpy as np
from jax import lax
from jax.experimental import pallas as pl
from jax.experimental.pallas import tpu as pltpu


# ----------------------------------------------------------------------------
# Generic fused linear kernel:  out = x @ w + b   (rows tiled, weights resident)
# Used for: per-layer input/gate projection, fused 3-head decoder.
# ----------------------------------------------------------------------------
def _linear_kernel(x_ref, w_ref, b_ref, o_ref):
    o_ref[...] = (jnp.dot(x_ref[...], w_ref[...],
                          preferred_element_type=jnp.float32)
                  + b_ref[...]).astype(o_ref.dtype)


def linear(x, w, b, *, row_tile=256):
    """x: (N, K), w: (K, M), b: (1, M) -> (N, M) float32."""
    N, K = x.shape
    M = w.shape[1]
    tn = N if N <= row_tile else row_tile
    grid = (pl.cdiv(N, tn),)
    return pl.pallas_call(
        _linear_kernel,
        out_shape=jax.ShapeDtypeStruct((N, M), jnp.float32),
        grid_spec=pltpu.PrefetchScalarGridSpec(
            num_scalar_prefetch=0,
            grid=grid,
            in_specs=[
                pl.BlockSpec((tn, K), lambda i: (i, 0)),
                pl.BlockSpec((K, M), lambda i: (0, 0)),   # weights resident
                pl.BlockSpec((1, M), lambda i: (0, 0)),
            ],
            out_specs=pl.BlockSpec((tn, M), lambda i: (i, 0)),
        ),
        compiler_params=pltpu.CompilerParams(
            dimension_semantics=("parallel",)),
    )(x, w, b)


# ----------------------------------------------------------------------------
# LSTM recurrence kernel: grid over time CHUNKS, fori_loop over t inside,
# h/c carried in VMEM scratch, single fused (B,4H) gate matmul per step.
# Input projection (Gx) is precomputed outside and streamed per chunk.
# ----------------------------------------------------------------------------
def _lstm_recurrence_kernel(gx_ref, h0_ref, c0_ref, whh_ref,
                            y_ref, hT_ref, cT_ref, h_sc, c_sc):
    blk = pl.program_id(0)

    @pl.when(blk == 0)
    def _():
        h_sc[...] = h0_ref[...]
        c_sc[...] = c0_ref[...]

    Tc = gx_ref.shape[0]          # time-chunk length (static)
    H = h0_ref.shape[-1]
    whh = whh_ref[...]            # (H, 4H) -- hoisted out of the time loop

    def step(t, carry):
        h = h_sc[...]
        c = c_sc[...]
        # one fused gate matmul + precomputed input projection (bias folded in)
        gates = gx_ref[t] + jnp.dot(h, whh,
                                    preferred_element_type=jnp.float32)  # (B,4H)
        # PyTorch gate order: i, f, g, o  (concatenated along the lane axis)
        i_g = jax.nn.sigmoid(gates[:, 0 * H:1 * H])
        f_g = jax.nn.sigmoid(gates[:, 1 * H:2 * H])
        g_g = jnp.tanh(gates[:, 2 * H:3 * H])
        o_g = jax.nn.sigmoid(gates[:, 3 * H:4 * H])
        c_new = f_g * c + i_g * g_g
        h_new = o_g * jnp.tanh(c_new)
        h_sc[...] = h_new
        c_sc[...] = c_new
        y_ref[t] = h_new
        return carry

    lax.fori_loop(0, Tc, step, 0, unroll=(Tc <= 16))

    @pl.when(blk == pl.num_programs(0) - 1)
    def _():
        hT_ref[...] = h_sc[...]
        cT_ref[...] = c_sc[...]


def _time_chunk(S, max_chunk=32):
    c = min(S, max_chunk)
    while S % c:
        c -= 1
    return c


def lstm_recurrence(gx, h0, c0, whh_cat):
    """gx: (S, B, 4H) gate pre-activations (input proj + bias already added)
       h0, c0: (B, H);  whh_cat: (H, 4H).  All float32, B a multiple of 8."""
    S, B, fourH = gx.shape
    H = fourH // 4
    Tc = _time_chunk(S)
    return pl.pallas_call(
        _lstm_recurrence_kernel,
        out_shape=(jax.ShapeDtypeStruct((S, B, H), jnp.float32),
                   jax.ShapeDtypeStruct((B, H), jnp.float32),
                   jax.ShapeDtypeStruct((B, H), jnp.float32)),
        grid_spec=pltpu.PrefetchScalarGridSpec(
            num_scalar_prefetch=0,
            grid=(S // Tc,),
            in_specs=[
                pl.BlockSpec((Tc, B, fourH), lambda t: (t, 0, 0)),
                pl.BlockSpec((B, H), lambda t: (0, 0)),
                pl.BlockSpec((B, H), lambda t: (0, 0)),
                pl.BlockSpec((H, fourH), lambda t: (0, 0)),   # resident weights
            ],
            out_specs=[
                pl.BlockSpec((Tc, B, H), lambda t: (t, 0, 0)),
                pl.BlockSpec((B, H), lambda t: (0, 0)),
                pl.BlockSpec((B, H), lambda t: (0, 0)),
            ],
            scratch_shapes=[pltpu.VMEM((B, H), jnp.float32),
                            pltpu.VMEM((B, H), jnp.float32)],
        ),
        compiler_params=pltpu.CompilerParams(
            dimension_semantics=("arbitrary",)),   # time chunks are sequential
    )(gx, h0, c0, whh_cat)


# ----------------------------------------------------------------------------
# Parameter init (matches PyTorch init ranges / layouts)
# ----------------------------------------------------------------------------
def init_params(key, ntoken_word, ntoken_phone, ninp, nhid, nlayers, qu_steps):
    initrange = 0.1
    keys = iter(jax.random.split(key, 64))
    uni = lambda k, shape, r: jax.random.uniform(k, shape, jnp.float32, -r, r)

    dec_phone_w = uni(next(keys), (ntoken_phone, nhid), initrange)   # (ntok, H)
    dec_word_w = uni(next(keys), (ntoken_word, nhid), initrange)
    dec_word2_w = uni(next(keys), (ntoken_word, nhid), initrange)

    params = {
        "emb_phone": uni(next(keys), (ntoken_phone, ninp), initrange),
        "emb_word": uni(next(keys), (ntoken_word, ninp), initrange),
        "emb_dursw": uni(next(keys), (qu_steps, qu_steps), initrange),
        "emb_dursp": uni(next(keys), (qu_steps, qu_steps), initrange),
        # fused decoder: (H, ntok_phone + 2*ntok_word), lane-dense output slab
        "dec_w_cat": jnp.concatenate(
            [dec_phone_w.T, dec_word_w.T, dec_word2_w.T], axis=1),
        "dec_b_cat": jnp.zeros((1, ntoken_phone + 2 * ntoken_word), jnp.float32),
        # kept for the pure-JAX reference
        "dec_phone_w": dec_phone_w.T, "dec_phone_b": jnp.zeros((1, ntoken_phone)),
        "dec_word_w": dec_word_w.T, "dec_word_b": jnp.zeros((1, ntoken_word)),
        "dec_word2_w": dec_word2_w.T, "dec_word2_b": jnp.zeros((1, ntoken_word)),
        "ntok_phone": ntoken_phone, "ntok_word": ntoken_word,
        "lstm": [],
    }

    ninp_rnn = 2 * ninp + 2 * qu_steps
    k_rng = 1.0 / np.sqrt(nhid)
    for layer in range(nlayers):
        din = ninp_rnn if layer == 0 else nhid
        W_ih = uni(next(keys), (4 * nhid, din), k_rng)   # PyTorch layout (4H, din)
        W_hh = uni(next(keys), (4 * nhid, nhid), k_rng)  # (4H, H)
        b_ih = uni(next(keys), (4 * nhid,), k_rng)
        b_hh = uni(next(keys), (4 * nhid,), k_rng)
        params["lstm"].append({
            # fused/pre-arranged for the kernels
            "wih_cat": W_ih.T,                              # (din, 4H)
            "whh_cat": W_hh.T,                              # (H, 4H)
            "b_cat": (b_ih + b_hh).reshape(1, 4 * nhid),    # (1, 4H)
            # raw copies for the reference
            "W_ih": W_ih, "W_hh": W_hh, "b_ih": b_ih, "b_hh": b_hh,
        })
    return params


def _pad_axis(x, target, axis):
    pad = target - x.shape[axis]
    if pad == 0:
        return x
    widths = [(0, 0)] * x.ndim
    widths[axis] = (0, pad)
    return jnp.pad(x, widths)


# ----------------------------------------------------------------------------
# Forward pass (eval mode; dropout = identity)
# ----------------------------------------------------------------------------
def forward(params, phone_ids, word_ids, dur_ids, hidden):
    emb = jnp.concatenate([params["emb_phone"][phone_ids],
                           params["emb_word"][word_ids],
                           params["emb_dursw"][dur_ids[:, :, 0]],
                           params["emb_dursp"][dur_ids[:, :, 1]]], axis=2)
    S, B, Din = emb.shape
    H = hidden[0].shape[-1]

    # pad batch to a sublane multiple of 8 (full (8,128) vregs in the kernels)
    B_pad = max(8, ((B + 7) // 8) * 8)
    x = _pad_axis(emb, B_pad, axis=1)                       # (S, B_pad, Din)
    h0 = _pad_axis(hidden[0], B_pad, axis=1)                # (L, B_pad, H)
    c0 = _pad_axis(hidden[1], B_pad, axis=1)

    hTs, cTs = [], []
    for layer, lp in enumerate(params["lstm"]):
        Sx, Bx, Dx = x.shape
        # input projection for the whole sequence: one lane-dense GEMM,
        # bias folded in -> nothing but h @ Whh remains on the serial path
        gx = linear(x.reshape(Sx * Bx, Dx), lp["wih_cat"], lp["b_cat"])
        gx = gx.reshape(Sx, Bx, 4 * H)
        x, hT, cT = lstm_recurrence(gx, h0[layer], c0[layer], lp["whh_cat"])
        hTs.append(hT)
        cTs.append(cT)

    # fused 3-head decoder: single matmul over a lane-dense output slab
    h_flat = x.reshape(S * B_pad, H)
    dec = linear(h_flat, params["dec_w_cat"], params["dec_b_cat"])
    dec = dec.reshape(S, B_pad, -1)[:, :B, :]

    P = params["ntok_phone"]
    W = params["ntok_word"]
    decoded_phone = dec[:, :, :P]
    decoded_word = dec[:, :, P:P + W]
    decoded_word2 = dec[:, :, P + W:P + 2 * W]

    new_hidden = (jnp.stack(hTs)[:, :B, :], jnp.stack(cTs)[:, :B, :])
    return (decoded_phone, decoded_word, decoded_word2), new_hidden


# ----------------------------------------------------------------------------
# Pure-JAX reference (for correctness check)
# ----------------------------------------------------------------------------
def _lstm_ref(x, h0, c0, W_ih, W_hh, b_ih, b_hh):
    def step(carry, xt):
        h, c = carry
        gates = xt @ W_ih.T + b_ih + h @ W_hh.T + b_hh
        i, f, g, o = jnp.split(gates, 4, axis=-1)
        i, f, o = jax.nn.sigmoid(i), jax.nn.sigmoid(f), jax.nn.sigmoid(o)
        g = jnp.tanh(g)
        c = f * c + i * g
        h = o * jnp.tanh(c)
        return (h, c), h
    (hT, cT), ys = jax.lax.scan(step, (h0, c0), x)
    return ys, hT, cT


def forward_ref(params, phone_ids, word_ids, dur_ids, hidden):
    emb = jnp.concatenate([params["emb_phone"][phone_ids],
                           params["emb_word"][word_ids],
                           params["emb_dursw"][dur_ids[:, :, 0]],
                           params["emb_dursp"][dur_ids[:, :, 1]]], axis=2)
    h0, c0 = hidden
    x = emb
    hTs, cTs = [], []
    for layer, lp in enumerate(params["lstm"]):
        x, hT, cT = _lstm_ref(x, h0[layer], c0[layer],
                              lp["W_ih"], lp["W_hh"], lp["b_ih"], lp["b_hh"])
        hTs.append(hT)
        cTs.append(cT)
    S, B, H = x.shape
    hf = x.reshape(S * B, H)
    dp = (hf @ params["dec_phone_w"] + params["dec_phone_b"]).reshape(S, B, -1)
    dw = (hf @ params["dec_word_w"] + params["dec_word_b"]).reshape(S, B, -1)
    dw2 = (hf @ params["dec_word2_w"] + params["dec_word2_b"]).reshape(S, B, -1)
    return (dp, dw, dw2), (jnp.stack(hTs), jnp.stack(cTs))


# ----------------------------------------------------------------------------
if __name__ == "__main__":
    ntoken_word, ntoken_phone = 40, 24
    ninp, nhid, nlayers, qu_steps = 16, 32, 2, 20
    S, B = 8, 4

    key = jax.random.PRNGKey(0)
    kp, kw, kd, kparam = jax.random.split(key, 4)

    params = init_params(kparam, ntoken_word, ntoken_phone,
                         ninp, nhid, nlayers, qu_steps)

    phone_ids = jax.random.randint(kp, (S, B), 0, ntoken_phone, jnp.int32)
    word_ids = jax.random.randint(kw, (S, B), 0, ntoken_word, jnp.int32)
    dur_ids = jax.random.randint(kd, (S, B, 2), 0, qu_steps, jnp.int32)

    # init_hidden(bsz) for LSTM: zeros (nlayers, B, nhid) x 2
    hidden = (jnp.zeros((nlayers, B, nhid), jnp.float32),
              jnp.zeros((nlayers, B, nhid), jnp.float32))

    (dp, dw, dw2), (hT, cT) = forward(params, phone_ids, word_ids, dur_ids,
                                      hidden)
    jax.block_until_ready((dp, dw, dw2, hT, cT))

    # correctness check against pure-JAX reference
    (rp, rw, rw2), (rhT, rcT) = forward_ref(params, phone_ids, word_ids,
                                            dur_ids, hidden)
    np.testing.assert_allclose(np.asarray(dp), np.asarray(rp), atol=1e-4)
    np.testing.assert_allclose(np.asarray(dw), np.asarray(rw), atol=1e-4)
    np.testing.assert_allclose(np.asarray(dw2), np.asarray(rw2), atol=1e-4)
    np.testing.assert_allclose(np.asarray(hT), np.asarray(rhT), atol=1e-4)
    np.testing.assert_allclose(np.asarray(cT), np.asarray(rcT), atol=1e-4)

    print("KERNEL_OK")
</pallas_src>

<mosaic_0001>
module attributes {stable_mosaic.version = 11 : i64} {
  func.func @_linear_kernel(%arg0: i32, %arg1: memref<64x72xf32, #tpu.memory_space<vmem>>, %arg2: memref<72x128xf32, #tpu.memory_space<vmem>>, %arg3: memref<1x128xf32, #tpu.memory_space<vmem>>, %arg4: memref<64x128xf32, #tpu.memory_space<vmem>>) attributes {dimension_semantics = [#tpu.dimension_semantics<parallel>], iteration_bounds = array<i64: 1>, scalar_prefetch = 0 : i64, scratch_operands = 0 : i64, tpu.core_type = #tpu.core_type<tc>, window_params = [{transform_indices = @transform_0, window_bounds = array<i64: 64, 72>}, {pipeline_mode = #tpu.pipeline_mode<synchronous>, transform_indices = @transform_1, window_bounds = array<i64: 72, 128>}, {pipeline_mode = #tpu.pipeline_mode<synchronous>, transform_indices = @transform_2, window_bounds = array<i64: 1, 128>}, {transform_indices = @transform_3, window_bounds = array<i64: 64, 128>}]} {
    %c0 = arith.constant 0 : index
    %c0_0 = arith.constant 0 : index
    %0 = vector.load %arg1[%c0, %c0_0] : memref<64x72xf32, #tpu.memory_space<vmem>>, vector<64x72xf32>
    %c0_1 = arith.constant 0 : index
    %c0_2 = arith.constant 0 : index
    %1 = vector.load %arg2[%c0_1, %c0_2] : memref<72x128xf32, #tpu.memory_space<vmem>>, vector<72x128xf32>
    %cst = arith.constant dense<0.000000e+00> : vector<64x128xf32>
    %2 = tpu.matmul %0, %1, %cst {dimension_numbers = #tpu.dot_dimension_numbers<[1], [0], [0], [1], [0, 0, 1, 1], [], []>} : vector<64x72xf32>, vector<72x128xf32>, vector<64x128xf32> -> vector<64x128xf32>
    %c0_3 = arith.constant 0 : index
    %c0_4 = arith.constant 0 : index
    %3 = vector.load %arg3[%c0_3, %c0_4] : memref<1x128xf32, #tpu.memory_space<vmem>>, vector<1x128xf32>
    %4 = vector.broadcast %3 : vector<1x128xf32> to vector<64x128xf32>
    %5 = arith.addf %2, %4 : vector<64x128xf32>
    %c0_5 = arith.constant 0 : index
    %c0_6 = arith.constant 0 : index
    %6 = vector.load %arg4[%c0_5, %c0_6] : memref<64x128xf32, #tpu.memory_space<vmem>>, vector<64x128xf32>
    tpu.vector_store %arg4[%c0_5, %c0_6], %5 {strides = array<i32>} : memref<64x128xf32, #tpu.memory_space<vmem>>, vector<64x128xf32>,
    return
  }
  func.func @transform_0(%arg0: i32) -> (i32, i32) {
    %c0_i32 = arith.constant 0 : i32
    %c0_i32_0 = arith.constant 0 : i32
    return %arg0, %c0_i32 : i32, i32
  }
  func.func @transform_1(%arg0: i32) -> (i32, i32) {
    %c0_i32 = arith.constant 0 : i32
    %c0_i32_0 = arith.constant 0 : i32
    %c0_i32_1 = arith.constant 0 : i32
    return %c0_i32, %c0_i32_0 : i32, i32
  }
  func.func @transform_2(%arg0: i32) -> (i32, i32) {
    %c0_i32 = arith.constant 0 : i32
    %c0_i32_0 = arith.constant 0 : i32
    %c0_i32_1 = arith.constant 0 : i32
    return %c0_i32, %c0_i32_0 : i32, i32
  }
  func.func @transform_3(%arg0: i32) -> (i32, i32) {
    %c0_i32 = arith.constant 0 : i32
    %c0_i32_0 = arith.constant 0 : i32
    return %arg0, %c0_i32 : i32, i32
  }
}

</mosaic_0001>

<llo_original>
// kernel: tpu_custom_call.1
$region0: #{tpu_custom_call.1}
  #allocation0 [shape = 'u32[]', space=smem, size = 0x4, offset = 0x4, fixed_abs, tag = 'smem constant byte address 0x4 - core index']
  #allocation1 [shape = 'u32[144,128]{1,0:T(1,128)}', space=vmem, size = 0x12000, scoped, tag = 'internal scratch']
  %s0 = inlined_call_operand.hbm [shape: f32[64,72], index: 0, kind: input, shape index: {}]
  %s1 = inlined_call_operand.hbm [shape: f32[72,128], index: 1, kind: input, shape index: {}]
  %s2 = inlined_call_operand.vmem [shape: f32[1,128], index: 2, kind: input, shape index: {}]
  %s3 = inlined_call_operand.hbm [shape: f32[64,128], index: 3, kind: output, shape index: {}]
  %s4 = sld [smem:[#allocation0]]
  $region30: #{tpu_custom_call.1} parent=0
    _
  %s6 = ssub.s32 1, %s4
  %s7 = scalar_select 0, %s6, %s4
  $region1: #{tpu_custom_call.1} parent=0
    #allocation2 [shape = 'u8[32768]{0}', space=vmem, size = 0x8000, scoped, tag = 'input window, operand 0, single buffered']
    #allocation3 [shape = 's32[1]{0}', space=sflag, size = 0x4, scoped, tag = 'scoped memory for tpu_custom_call.1']
    #allocation4 [shape = 's32[1]{0}', space=sflag, size = 0x4, scoped, tag = 'scoped memory for tpu_custom_call.1']
    #allocation5 [shape = 'u8[36864]{0}', space=vmem, size = 0x9000, scoped, tag = 'input window, operand 1, single buffered']
    #allocation6 [shape = 's32[1]{0}', space=sflag, size = 0x4, scoped, tag = 'scoped memory for tpu_custom_call.1']
    #allocation7 [shape = 'u8[32768]{0}', space=vmem, size = 0x8000, scoped, tag = 'output window, operand 0, single buffered']
    %8 = vsyncpa [#allocation3], 0
    %9 = vsyncpa [#allocation6], 0
    %10 = vsyncpa [#allocation4], 0
    // Predicated region
    $region2: #{tpu_custom_call.1} parent=1 // pred_check
      _
    $region3: #{tpu_custom_call.1} parent=1 // pred_check_branch
      %12 = sbr.rel (0) target = $region5
    $region4: #{tpu_custom_call.1} parent=1 // pred_region
      %s14 = ssub.s32 1024, 1024
      %15 = vsyncadd [#allocation3], %s14
      %s16 = sshll.u32 [#allocation2], 4
      %s17 = int_to_ptr.vmem [resolvable:$true] %s16
      %22 = dma.hbm_to_vmem [thread:$0]  %s0, 1024, %s17, [#allocation3], 128, 128, 8
    $region5: #{tpu_custom_call.1} parent=1 // pred_fallthru
      _
    // Predicated region
    $region6: #{tpu_custom_call.1} parent=1 // pred_check
      _
    $region7: #{tpu_custom_call.1} parent=1 // pred_check_branch
      %24 = sbr.rel (0) target = $region9
    $region8: #{tpu_custom_call.1} parent=1 // pred_region
      %s26 = ssub.s32 1152, 1152
      %27 = vsyncadd [#allocation6], %s26
      %s28 = sshll.u32 [#allocation5], 4
      %s29 = int_to_ptr.vmem [resolvable:$true] %s28
      %34 = dma.hbm_to_vmem [thread:$0]  %s1, 1152, %s29, [#allocation6], 128, 128, 8
    $region9: #{tpu_custom_call.1} parent=1 // pred_fallthru
      _
    // Predicated region
    $region10: #{tpu_custom_call.1} parent=1 // pred_check
      _
    $region11: #{tpu_custom_call.1} parent=1 // pred_check_branch
      %36 = sbr.rel (0) target = $region13
    $region12: #{tpu_custom_call.1} parent=1 // pred_region
      _
    $region13: #{tpu_custom_call.1} parent=1 // pred_fallthru
      _
    // Predicated region
    $region14: #{tpu_custom_call.1} parent=1 // pred_check
      _
    $region15: #{tpu_custom_call.1} parent=1 // pred_check_branch
      %38 = sbr.rel (0) target = $region17
    $region16: #{tpu_custom_call.1} parent=1 // pred_region
      %39 = dma.done [#allocation3], 1024
    $region17: #{tpu_custom_call.1} parent=1 // pred_fallthru
      _
    // Predicated region
    $region18: #{tpu_custom_call.1} parent=1 // pred_check
      _
    $region19: #{tpu_custom_call.1} parent=1 // pred_check_branch
      %41 = sbr.rel (0) target = $region21
    $region20: #{tpu_custom_call.1} parent=1 // pred_region
      %42 = dma.done [#allocation6], 1152
    $region21: #{tpu_custom_call.1} parent=1 // pred_fallthru
      _
    %v43 = vld [vmem:[#allocation2] sm:$0xff]
    %v44 = vld [vmem:[#allocation2 + $0x8] sm:$0xff]
    %v45 = vld [vmem:[#allocation2 + $0x10] sm:$0xff]
    %v46 = vld [vmem:[#allocation2 + $0x18] sm:$0xff]
    %v47 = vld [vmem:[#allocation2 + $0x20] sm:$0xff]
    %v48 = vld [vmem:[#allocation2 + $0x28] sm:$0xff]
    %v49 = vld [vmem:[#allocation2 + $0x30] sm:$0xff]
    %v50 = vld [vmem:[#allocation2 + $0x38] sm:$0xff]
    %v51 = vld [vmem:[#allocation5] sm:$0xff]
    %v52 = vld [vmem:[#allocation5 + $0x8] sm:$0xff]
    %v53 = vld [vmem:[#allocation5 + $0x10] sm:$0xff]
    %v54 = vld [vmem:[#allocation5 + $0x18] sm:$0xff]
    %v55 = vld [vmem:[#allocation5 + $0x20] sm:$0xff]
    %v56 = vld [vmem:[#allocation5 + $0x28] sm:$0xff]
    %v57 = vld [vmem:[#allocation5 + $0x30] sm:$0xff]
    %v58 = vld [vmem:[#allocation5 + $0x38] sm:$0xff]
    %v59 = vld [vmem:[#allocation5 + $0x40] sm:$0xff]
    %v60 = vld [vmem:[%s2] sm:$0x1]
    %v62 = vlaneseq
    %v63 = vshrl.u32 %v62, 7
    %v64 = vsub.s32 0, %v63
    %v65 = vrot.slane %v60, %v64
    %vm67 = vcmask 588800
    %v69 = vsel %vm67, %v43, 0
    %v72 = vsel %vm67, %v44, 0
    %v75 = vsel %vm67, %v45, 0
    %v78 = vsel %vm67, %v46, 0
    %v81 = vsel %vm67, %v47, 0
    %v84 = vsel %vm67, %v48, 0
    %v87 = vsel %vm67, %v49, 0
    %v90 = vsel %vm67, %v50, 0
    %92 = vmatprep.subr.mxu0 0.0
    %93 = vmatpush1.msra.mxu0 %v51
    %94 = vmatprep.subr.mxu0 0.0
    %95 = vmatpush1.msra.mxu0 %v52
    %96 = vmatprep.subr.mxu0 0.0
    %97 = vmatpush1.msra.mxu0 %v53
    %98 = vmatprep.subr.mxu0 0.0
    %99 = vmatpush1.msra.mxu0 %v54
    %100 = vmatprep.subr.mxu0 0.0
    %101 = vmatpush1.msra.mxu0 %v55
    %102 = vmatprep.subr.mxu0 0.0
    %103 = vmatpush1.msra.mxu0 %v56
    %104 = vmatprep.subr.mxu0 0.0
    %105 = vmatpush1.msra.mxu0 %v57
    %106 = vmatprep.subr.mxu0 0.0
    %107 = vmatpush1.msra.mxu0 %v58
    %108 = vmatprep.subr.mxu0 0.0
    %109 = vmatpush1.msra.mxu0 %v59
    %110 = vmatprep.subr.mxu0 0.0
    %111 = vmatpush1.msra.mxu0 0.0
    %112 = vmatprep.subr.mxu0 0.0
    %113 = vmatpush1.msra.mxu0 0.0
    %114 = vmatprep.subr.mxu0 0.0
    %115 = vmatpush1.msra.mxu0 0.0
    %116 = vmatprep.subr.mxu0 0.0
    %117 = vmatpush1.msra.mxu0 0.0
    %118 = vmatprep.subr.mxu0 0.0
    %119 = vmatpush1.msra.mxu0 0.0
    %120 = vmatprep.subr.mxu0 0.0
    %121 = vmatpush1.msra.mxu0 0.0
    %122 = vmatprep.subr.mxu0 0.0
    %123 = vmatpush1.msra.mxu0 0.0
    %124 = vmatprep.subr.mxu0 0.0
    %125 = vmatpush1.msra.mxu0 0.0
    %126 = vmatprep.subr.mxu0 0.0
    %127 = vmatpush1.msra.mxu0 0.0
    %128 = vmatprep.subr.mxu0 0.0
    %129 = vmatpush1.msra.mxu0 0.0
    %130 = vmatprep.subr.mxu0 0.0
    %131 = vmatpush1.msra.mxu0 0.0
    %132 = vmatprep.subr.mxu0 0.0
    %133 = vmatpush1.msra.mxu0 0.0
    %134 = vmatprep.subr.mxu0 0.0
    %135 = vmatpush1.msra.mxu0 0.0
    %136 = vmatprep.subr.mxu0 0.0
    %137 = vmatpush1.msra.mxu0 0.0
    %138 = vmatprep.subr.mxu0 0.0
    %139 = vmatpush1.msra.mxu0 0.0
    %140 = vmatprep.subr.mxu0 0.0
    %141 = vmatpush1.msra.mxu0 0.0
    %142 = vmatprep.subr.mxu0 0.0
    %143 = vmatpush1.msra.mxu0 0.0
    %144 = vmatprep.subr.mxu0 0.0
    %145 = vmatpush1.msra.mxu0 0.0
    %146 = vmatprep.subr.mxu0 0.0
    %147 = vmatpush1.msra.mxu0 0.0
    %148 = vmatprep.subr.mxu0 0.0
    %149 = vmatpush1.msra.mxu0 0.0
    %150 = vmatprep.subr.mxu0 0.0
    %151 = vmatpush1.msra.mxu0 0.0
    %152 = vmatprep.subr.mxu0 0.0
    %153 = vmatpush1.msra.mxu0 0.0
    %154 = vmatprep.subr.mxu0 0.0
    %155 = vmatpush1.msra.mxu0 0.0
    %156 = vmatprep.mubr.f32.mxu0 0.0
    %157 = vmatmul.mubr.f32.gmra.mrb[0].mxu0 %v69
    %v158 = vpop.f32.mrb[0].mxu0
    %v159 = vadd.f32 %v65, %v158
    %v160 = vpop.f32.mrb[0].mxu0
    %161 = vmatprep.mubr.f32.mxu0 0.0
    %162 = vmatmul.mubr.f32.gmra.mrb[0].mxu0 %v72
    %v163 = vpop.f32.mrb[0].mxu0
    %v164 = vadd.f32 %v65, %v163
    %v165 = vpop.f32.mrb[0].mxu0
    %166 = vmatprep.mubr.f32.mxu0 0.0
    %167 = vmatmul.mubr.f32.gmra.mrb[0].mxu0 %v75
    %v168 = vpop.f32.mrb[0].mxu0
    %v169 = vadd.f32 %v65, %v168
    %v170 = vpop.f32.mrb[0].mxu0
    %171 = vmatprep.mubr.f32.mxu0 0.0
    %172 = vmatmul.mubr.f32.gmra.mrb[0].mxu0 %v78
    %v173 = vpop.f32.mrb[0].mxu0
    %v174 = vadd.f32 %v65, %v173
    %v175 = vpop.f32.mrb[0].mxu0
    %176 = vmatprep.mubr.f32.mxu0 0.0
    %177 = vmatmul.mubr.f32.gmra.mrb[0].mxu0 %v81
    %v178 = vpop.f32.mrb[0].mxu0
    %v179 = vadd.f32 %v65, %v178
    %v180 = vpop.f32.mrb[0].mxu0
    %181 = vmatprep.mubr.f32.mxu0 0.0
    %182 = vmatmul.mubr.f32.gmra.mrb[0].mxu0 %v84
    %v183 = vpop.f32.mrb[0].mxu0
    %v184 = vadd.f32 %v65, %v183
    %v185 = vpop.f32.mrb[0].mxu0
    %186 = vmatprep.mubr.f32.mxu0 0.0
    %187 = vmatmul.mubr.f32.gmra.mrb[0].mxu0 %v87
    %v188 = vpop.f32.mrb[0].mxu0
    %v189 = vadd.f32 %v65, %v188
    %v190 = vpop.f32.mrb[0].mxu0
    %191 = vmatprep.mubr.f32.mxu0 0.0
    %192 = vmatmul.mubr.f32.gmra.mrb[0].mxu0 %v90
    %v193 = vpop.f32.mrb[0].mxu0
    %v194 = vadd.f32 %v65, %v193
    %v195 = vpop.f32.mrb[0].mxu0
    %196 = vdwg.mxu0
    %197 = vst [vmem:[#allocation7] sm:$0xff] %v159
    %198 = vst [vmem:[#allocation7 + $0x8] sm:$0xff] %v164
    %199 = vst [vmem:[#allocation7 + $0x10] sm:$0xff] %v169
    %200 = vst [vmem:[#allocation7 + $0x18] sm:$0xff] %v174
    %201 = vst [vmem:[#allocation7 + $0x20] sm:$0xff] %v179
    %202 = vst [vmem:[#allocation7 + $0x28] sm:$0xff] %v184
    %203 = vst [vmem:[#allocation7 + $0x30] sm:$0xff] %v189
    %204 = vst [vmem:[#allocation7 + $0x38] sm:$0xff] %v194
    // Predicated region
    $region22: #{tpu_custom_call.1} parent=1 // pred_check
      _
    $region23: #{tpu_custom_call.1} parent=1 // pred_check_branch
      %206 = sbr.rel (0) target = $region25
    $region24: #{tpu_custom_call.1} parent=1 // pred_region
      %s208 = ssub.s32 1024, 1024
      %209 = vsyncadd [#allocation4], %s208
      %s210 = sshll.u32 [#allocation7], 4
      %s211 = int_to_ptr.vmem [resolvable:$true] %s210
      %216 = dma.vmem_to_hbm [thread:$0]  %s211, 1024, %s3, [#allocation4], 128, 128, 8
    $region25: #{tpu_custom_call.1} parent=1 // pred_fallthru
      _
    // Predicated region
    $region26: #{tpu_custom_call.1} parent=1 // pred_check
      _
    $region27: #{tpu_custom_call.1} parent=1 // pred_check_branch
      %218 = sbr.rel (0) target = $region29
    $region28: #{tpu_custom_call.1} parent=1 // pred_region
      %219 = dma.done [#allocation4], 1024
    $region29: #{tpu_custom_call.1} parent=1 // pred_fallthru
      _
    %220 = vsyncpa [#allocation3], 1
    %221 = vsyncpa [#allocation6], 1
    %222 = vsyncpa [#allocation4], 1

</llo_original>
